<compile_context>
chip_gen: v6e
topology: v6e:2x2x1
jax: 0.10.0
libtpu: 0.0.40
codegen_flags: <defaults>
</compile_context>

<pallas_src>
import jax
import jax.numpy as jnp
from jax import lax
from jax.experimental import pallas as pl
from jax.experimental.pallas import tpu as pltpu


def _ntxent_kernel(temp_ref, q_ref, kv_ref, pos_ref, lp_ref, acc_ref):
    """One (block_q, block_kv) tile of the NT-Xent denominator accumulation."""
    kv_idx = pl.program_id(1)
    inv_temp = 1.0 / temp_ref[0]            # one scalar reciprocal, not N^2 divides

    @pl.when(kv_idx == 0)
    def _init():
        acc_ref[...] = jnp.zeros_like(acc_ref)

    # (block_q, D) x (block_kv, D) contracted on the feature axis -> (block_q, block_kv).
    # No transpose copy; bf16 operands feed the MXU, accumulation is f32.
    dn = (((1,), (1,)), ((), ()))
    s = lax.dot_general(q_ref[...], kv_ref[...], dn,
                        preferred_element_type=jnp.float32)

    # Statically max-shifted softmax denominator: cosine sim <= 1 after L2 norm, so
    # (s - 1) * inv_temp <= 0 and exp never overflows for any temperature.
    acc_ref[...] += jnp.sum(jnp.exp((s - 1.0) * inv_temp), axis=1, keepdims=True)

    @pl.when(kv_idx == pl.num_programs(1) - 1)
    def _finalize():
        # diag(sim) == 1, so its shifted contribution is exactly exp(0) == 1:
        # subtract it instead of building an NxN off-diagonal mask.
        denom_shifted = acc_ref[...] - 1.0
        # loss_partial = log(sum_{c != r} exp(sim/T)) - pos/T
        #              = log(denom_shifted) + (1 - pos) * inv_temp
        lp_ref[...] = jnp.log(denom_shifted) + (1.0 - pos_ref[...]) * inv_temp


def _pick_block(n, target):
    # Full extent when small or when `target` does not divide evenly (keeps the
    # BlockSpec trivially legal for arbitrary test shapes).
    if n <= target or n % target:
        return n
    return target


def contrastive_loss(emb_i, emb_j, temperature=0.5, *,
                     operand_dtype=jnp.bfloat16, block_q=512, block_kv=1024):
    """NT-Xent loss.  O(N*D) prep in XLA; the O(N^2) sim/exp/reduce is the Pallas kernel."""
    assert emb_i.shape == emb_j.shape and emb_i.ndim == 2
    span, dim = emb_i.shape
    n2 = 2 * span

    def l2_normalize(x):
        # F.normalize(x, dim=1) with eps=1e-12  ->  x * rsqrt(max(sumsq, 1e-24))
        x = x.astype(jnp.float32)
        sumsq = jnp.sum(x * x, axis=1, keepdims=True)
        return x * lax.rsqrt(jnp.maximum(sumsq, 1e-24))

    z_i = l2_normalize(emb_i)
    z_j = l2_normalize(emb_j)
    reps = jnp.concatenate([z_i, z_j], axis=0)               # (2N, D) f32
    p = jnp.sum(z_i * z_j, axis=1, keepdims=True)            # positives (f32, exact)
    pos = jnp.concatenate([p, p], axis=0)                     # (2N, 1)

    # bf16 operand blocks: ~2x MXU throughput on v6e/v7x and half the per-step DMA
    # bytes / VMEM footprint; exp/log/accumulation stay f32 inside the kernel.
    reps_mxu = reps.astype(operand_dtype)

    bq = _pick_block(n2, block_q)
    bkv = _pick_block(n2, block_kv)
    grid = (n2 // bq, n2 // bkv)

    temp = jnp.asarray([temperature], dtype=jnp.float32)

    # VMEM budget (per step): 2*(bq+bkv)*D*operand_bytes (double-buffered inputs)
    # + bq*bkv*4 sim tile + small accumulators -- default tiles stay well under the
    # 32 MiB scoped default even on v7x, so no vmem_limit_bytes override is needed.
    lp = pl.pallas_call(
        _ntxent_kernel,
        out_shape=jax.ShapeDtypeStruct((n2, 1), jnp.float32),
        grid=grid,
        in_specs=[
            pl.BlockSpec(memory_space=pltpu.MemorySpace.SMEM),     # temperature (1,)
            pl.BlockSpec((bq, dim), lambda qi, ki: (qi, 0)),       # reps, q rows
            pl.BlockSpec((bkv, dim), lambda qi, ki: (ki, 0)),      # reps, kv rows
            pl.BlockSpec((bq, 1), lambda qi, ki: (qi, 0)),         # positives
        ],
        out_specs=pl.BlockSpec((bq, 1), lambda qi, ki: (qi, 0)),   # per-row loss_partial
        scratch_shapes=[pltpu.VMEM((bq, 1), jnp.float32)],         # running row denominator
        compiler_params=pltpu.CompilerParams(
            dimension_semantics=("parallel", "arbitrary")),
    )(temp, reps_mxu, reps_mxu, pos)

    return jnp.sum(lp) / n2


def _reference_loss(emb_i, emb_j, temperature=0.5):
    # pure-JAX mirror of the PyTorch forward, for verification
    span = emb_i.shape[0]
    z_i = emb_i / jnp.maximum(jnp.linalg.norm(emb_i, axis=1, keepdims=True), 1e-12)
    z_j = emb_j / jnp.maximum(jnp.linalg.norm(emb_j, axis=1, keepdims=True), 1e-12)
    reps = jnp.concatenate([z_i, z_j], axis=0)
    sim = reps @ reps.T
    sim_ij = jnp.diagonal(sim, offset=span)
    sim_ji = jnp.diagonal(sim, offset=-span)
    positives = jnp.concatenate([sim_ij, sim_ji], axis=0)
    nominator = jnp.exp(positives / temperature)
    negatives_mask = ~jnp.eye(2 * span, dtype=bool)
    denominator = jnp.sum(negatives_mask * jnp.exp(sim / temperature), axis=1)
    loss_partial = -jnp.log(nominator / denominator)
    return jnp.sum(loss_partial) / (2 * span)


if __name__ == "__main__":
    key = jax.random.PRNGKey(0)
    k1, k2 = jax.random.split(key)
    span, dim = 8, 32
    emb_i = jax.random.normal(k1, (span, dim), dtype=jnp.float32)
    emb_j = jax.random.normal(k2, (span, dim), dtype=jnp.float32)

    ref = _reference_loss(emb_i, emb_j, temperature=0.5)

    # Exact-math path (f32 MXU operands): tight tolerance.
    loss_f32 = contrastive_loss(emb_i, emb_j, 0.5, operand_dtype=jnp.float32)
    jax.block_until_ready(loss_f32)
    assert jnp.allclose(loss_f32, ref, rtol=1e-4, atol=1e-4), (loss_f32, ref)

    # Default fast path (bf16 MXU operands per v6e/v7x feedback): ~1e-3-level
    # perturbation of the sim entries, so a looser-but-meaningful tolerance.
    loss = contrastive_loss(emb_i, emb_j, 0.5)
    jax.block_until_ready(loss)
    assert jnp.allclose(loss, ref, rtol=3e-2, atol=3e-2), (loss, ref)

    print("KERNEL_OK")
</pallas_src>

<mosaic_0001>
module attributes {stable_mosaic.version = 11 : i64} {
  func.func @_ntxent_kernel(%arg0: i32, %arg1: i32, %arg2: memref<1xf32, #tpu.memory_space<smem>>, %arg3: memref<16x32xf32, #tpu.memory_space<vmem>>, %arg4: memref<16x32xf32, #tpu.memory_space<vmem>>, %arg5: memref<16x1xf32, #tpu.memory_space<vmem>>, %arg6: memref<16x1xf32, #tpu.memory_space<vmem>>, %arg7: memref<16x1xf32, #tpu.memory_space<vmem>>) attributes {dimension_semantics = [#tpu.dimension_semantics<parallel>, #tpu.dimension_semantics<arbitrary>], iteration_bounds = array<i64: 1, 1>, scalar_prefetch = 0 : i64, scratch_operands = 1 : i64, tpu.core_type = #tpu.core_type<tc>, window_params = [{transform_indices = @transform_0, window_bounds = array<i64: 1>}, {transform_indices = @transform_1, window_bounds = array<i64: 16, 32>}, {transform_indices = @transform_2, window_bounds = array<i64: 16, 32>}, {transform_indices = @transform_3, window_bounds = array<i64: 16, 1>}, {transform_indices = @transform_4, window_bounds = array<i64: 16, 1>}]} {
    %c0 = arith.constant 0 : index
    %0 = memref.load %arg2[%c0] : memref<1xf32, #tpu.memory_space<smem>>
    %cst = arith.constant 1.000000e+00 : f32
    %1 = arith.divf %cst, %0 : f32
    %c0_i32 = arith.constant 0 : i32
    %2 = arith.cmpi eq, %arg1, %c0_i32 : i32
    %3 = arith.extui %2 : i1 to i32
    %c0_i32_0 = arith.constant 0 : i32
    %4 = arith.cmpi ne, %3, %c0_i32_0 : i32
    scf.if %4 {
      %cst_14 = arith.constant 0.000000e+00 : f32
      %21 = vector.broadcast %cst_14 : f32 to vector<16x1xf32>
      %c0_15 = arith.constant 0 : index
      %c0_16 = arith.constant 0 : index
      %22 = vector.load %arg7[%c0_15, %c0_16] : memref<16x1xf32, #tpu.memory_space<vmem>>, vector<16x1xf32>
      tpu.vector_store %arg7[%c0_15, %c0_16], %21 {strides = array<i32>} : memref<16x1xf32, #tpu.memory_space<vmem>>, vector<16x1xf32>,
    } else {
    }
    %c0_1 = arith.constant 0 : index
    %c0_2 = arith.constant 0 : index
    %5 = vector.load %arg3[%c0_1, %c0_2] : memref<16x32xf32, #tpu.memory_space<vmem>>, vector<16x32xf32>
    %c0_3 = arith.constant 0 : index
    %c0_4 = arith.constant 0 : index
    %6 = vector.load %arg4[%c0_3, %c0_4] : memref<16x32xf32, #tpu.memory_space<vmem>>, vector<16x32xf32>
    %cst_5 = arith.constant dense<0.000000e+00> : vector<16x16xf32>
    %7 = tpu.matmul %5, %6, %cst_5 {dimension_numbers = #tpu.dot_dimension_numbers<[1], [1], [0], [0], [0, 0, 1, 0], [], []>} : vector<16x32xf32>, vector<16x32xf32>, vector<16x16xf32> -> vector<16x16xf32>
    %c0_6 = arith.constant 0 : index
    %c0_7 = arith.constant 0 : index
    %8 = vector.load %arg7[%c0_6, %c0_7] : memref<16x1xf32, #tpu.memory_space<vmem>>, vector<16x1xf32>
    %cst_8 = arith.constant 1.000000e+00 : f32
    %9 = vector.broadcast %cst_8 : f32 to vector<16x16xf32>
    %10 = arith.subf %7, %9 : vector<16x16xf32>
    %11 = vector.broadcast %1 : f32 to vector<16x16xf32>
    %12 = arith.mulf %10, %11 : vector<16x16xf32>
    %13 = math.exp %12 : vector<16x16xf32>
    %cst_9 = arith.constant dense<0.000000e+00> : vector<16xf32>
    %14 = vector.multi_reduction <add>, %13, %cst_9 [1] : vector<16x16xf32> to vector<16xf32>
    %15 = vector.shape_cast %14 : vector<16xf32> to vector<16x1xf32>
    %16 = arith.addf %8, %15 : vector<16x1xf32>
    %c0_10 = arith.constant 0 : index
    %c0_11 = arith.constant 0 : index
    %17 = vector.load %arg7[%c0_10, %c0_11] : memref<16x1xf32, #tpu.memory_space<vmem>>, vector<16x1xf32>
    tpu.vector_store %arg7[%c0_10, %c0_11], %16 {strides = array<i32>} : memref<16x1xf32, #tpu.memory_space<vmem>>, vector<16x1xf32>,
    %c0_i32_12 = arith.constant 0 : i32
    %18 = arith.cmpi eq, %arg1, %c0_i32_12 : i32
    %19 = arith.extui %18 : i1 to i32
    %c0_i32_13 = arith.constant 0 : i32
    %20 = arith.cmpi ne, %19, %c0_i32_13 : i32
    scf.if %20 {
      %c0_14 = arith.constant 0 : index
      %c0_15 = arith.constant 0 : index
      %21 = vector.load %arg7[%c0_14, %c0_15] : memref<16x1xf32, #tpu.memory_space<vmem>>, vector<16x1xf32>
      %cst_16 = arith.constant 1.000000e+00 : f32
      %22 = vector.broadcast %cst_16 : f32 to vector<16x1xf32>
      %23 = arith.subf %21, %22 : vector<16x1xf32>
      %24 = math.log %23 : vector<16x1xf32>
      %c0_17 = arith.constant 0 : index
      %c0_18 = arith.constant 0 : index
      %25 = vector.load %arg5[%c0_17, %c0_18] : memref<16x1xf32, #tpu.memory_space<vmem>>, vector<16x1xf32>
      %cst_19 = arith.constant 1.000000e+00 : f32
      %26 = vector.broadcast %cst_19 : f32 to vector<16x1xf32>
      %27 = arith.subf %26, %25 : vector<16x1xf32>
      %28 = vector.broadcast %1 : f32 to vector<16x1xf32>
      %29 = arith.mulf %27, %28 : vector<16x1xf32>
      %30 = arith.addf %24, %29 : vector<16x1xf32>
      %c0_20 = arith.constant 0 : index
      %c0_21 = arith.constant 0 : index
      %31 = vector.load %arg6[%c0_20, %c0_21] : memref<16x1xf32, #tpu.memory_space<vmem>>, vector<16x1xf32>
      tpu.vector_store %arg6[%c0_20, %c0_21], %30 {strides = array<i32>} : memref<16x1xf32, #tpu.memory_space<vmem>>, vector<16x1xf32>,
    } else {
    }
    return
  }
  func.func @transform_0(%arg0: i32, %arg1: i32) -> i32 {
    %c0_i32 = arith.constant 0 : i32
    %c0_i32_0 = arith.constant 0 : i32
    return %c0_i32 : i32
  }
  func.func @transform_1(%arg0: i32, %arg1: i32) -> (i32, i32) {
    %c0_i32 = arith.constant 0 : i32
    %c0_i32_0 = arith.constant 0 : i32
    return %arg0, %c0_i32 : i32, i32
  }
  func.func @transform_2(%arg0: i32, %arg1: i32) -> (i32, i32) {
    %c0_i32 = arith.constant 0 : i32
    %c0_i32_0 = arith.constant 0 : i32
    return %arg1, %c0_i32 : i32, i32
  }
  func.func @transform_3(%arg0: i32, %arg1: i32) -> (i32, i32) {
    %c0_i32 = arith.constant 0 : i32
    %c0_i32_0 = arith.constant 0 : i32
    return %arg0, %c0_i32 : i32, i32
  }
  func.func @transform_4(%arg0: i32, %arg1: i32) -> (i32, i32) {
    %c0_i32 = arith.constant 0 : i32
    %c0_i32_0 = arith.constant 0 : i32
    return %arg0, %c0_i32 : i32, i32
  }
}

</mosaic_0001>

<llo_original>
// kernel: tpu_custom_call.1
$region0: #{tpu_custom_call.1}
  #allocation0 [shape = 'u32[]', space=smem, size = 0x4, offset = 0x4, fixed_abs, tag = 'smem constant byte address 0x4 - core index']
  #allocation1 [shape = 'u32[144,128]{1,0:T(1,128)}', space=vmem, size = 0x12000, scoped, tag = 'internal scratch']
  #allocation2 [shape = 'f32[16,1]{1,0:T(8,128)}', space=vmem, size = 0x2000, scoped, tag = 'scratch operand']
  #allocation3 [shape = 'f32[1]{0:T(128)S(6)}', space=smem, size = 0x200, scoped, tag = 'scoped memory for tpu_custom_call.1']
  %s0 = inlined_call_operand.<no memory space> [shape: f32[1], index: 0, kind: input, shape index: {}]
  %s1 = inlined_call_operand.vmem [shape: f32[16,32], index: 1, kind: input, shape index: {}]
  %s2 = inlined_call_operand.hbm [shape: f32[16,32], index: 2, kind: input, shape index: {}]
  %s3 = inlined_call_operand.vmem [shape: f32[16,1], index: 3, kind: input, shape index: {}]
  %s4 = inlined_call_operand.vmem [shape: f32[16,1], index: 4, kind: output, shape index: {}]
  %s5 = sld [smem:[#allocation0]]
  $region38: #{tpu_custom_call.1} parent=0
    _
  %s7 = ssub.s32 1, %s5
  %s8 = scalar_select 0, %s7, %s5
  %9 = sst [smem:[#allocation3]] %s0
  $region1: #{tpu_custom_call.1} parent=0
    #allocation4 [shape = 'u8[8192]{0}', space=vmem, size = 0x2000, scoped, tag = 'input window, operand 2, single buffered']
    #allocation5 [shape = 's32[1]{0}', space=sflag, size = 0x4, scoped, tag = 'scoped memory for tpu_custom_call.1']
    %10 = vsyncpa [#allocation5], 0
    // Predicated region
    $region2: #{tpu_custom_call.1} parent=1 // pred_check
      _
    $region3: #{tpu_custom_call.1} parent=1 // pred_check_branch
      %12 = sbr.rel (0) target = $region5
    $region4: #{tpu_custom_call.1} parent=1 // pred_region
      _
    $region5: #{tpu_custom_call.1} parent=1 // pred_fallthru
      _
    // Predicated region
    $region6: #{tpu_custom_call.1} parent=1 // pred_check
      _
    $region7: #{tpu_custom_call.1} parent=1 // pred_check_branch
      %14 = sbr.rel (0) target = $region9
    $region8: #{tpu_custom_call.1} parent=1 // pred_region
      _
    $region9: #{tpu_custom_call.1} parent=1 // pred_fallthru
      _
    // Predicated region
    $region10: #{tpu_custom_call.1} parent=1 // pred_check
      _
    $region11: #{tpu_custom_call.1} parent=1 // pred_check_branch
      %16 = sbr.rel (0) target = $region13
    $region12: #{tpu_custom_call.1} parent=1 // pred_region
      %s18 = ssub.s32 256, 256
      %19 = vsyncadd [#allocation5], %s18
      %s20 = sshll.u32 [#allocation4], 4
      %s21 = int_to_ptr.vmem [resolvable:$true] %s20
      %26 = dma.hbm_to_vmem [thread:$0]  %s2, 256, %s21, [#allocation5], 128, 128, 8
    $region13: #{tpu_custom_call.1} parent=1 // pred_fallthru
      _
    // Predicated region
    $region14: #{tpu_custom_call.1} parent=1 // pred_check
      _
    $region15: #{tpu_custom_call.1} parent=1 // pred_check_branch
      %28 = sbr.rel (0) target = $region17
    $region16: #{tpu_custom_call.1} parent=1 // pred_region
      _
    $region17: #{tpu_custom_call.1} parent=1 // pred_fallthru
      _
    // Predicated region
    $region18: #{tpu_custom_call.1} parent=1 // pred_check
      _
    $region19: #{tpu_custom_call.1} parent=1 // pred_check_branch
      %30 = sbr.rel (0) target = $region21
    $region20: #{tpu_custom_call.1} parent=1 // pred_region
      %31 = dma.done [#allocation5], 256
    $region21: #{tpu_custom_call.1} parent=1 // pred_fallthru
      _
    %s32 = sld [smem:[#allocation3]]
    %v33 = vstv %s32
    %v34 = vrcp.pop %v33
    %s35 = vtos %v34
    %p36 = scmp.eq.s32.totalorder 0, 0
    // Predicated region
    $region22: #{tpu_custom_call.1} parent=1 // pred_check
      %p37 = pneg %p36
    $region23: #{tpu_custom_call.1} parent=1 // pred_check_branch
      %39 = sbr.rel (%p37) target = $region25
    $region24: #{tpu_custom_call.1} parent=1 // pred_region
      %vm40 = vcmask 7168
      %41 = vst.msk [vmem:[#allocation2] sm:$0xff] %vm40, 0.0
      %42 = vst.msk [vmem:[#allocation2 + $0x8] sm:$0xff] %vm40, 0.0
    $region25: #{tpu_custom_call.1} parent=1 // pred_fallthru
      _
    %v43 = vld [vmem:[%s1] sm:$0xff]
    %v44 = vld [vmem:[%s1 + $0x8] sm:$0xff]
    %v45 = vld [vmem:[#allocation4] sm:$0xff]
    %v46 = vld [vmem:[#allocation4 + $0x8] sm:$0xff]
    %vm47 = vcmask 261120
    %v49 = vsel %vm47, %v43, 0
    %v52 = vsel %vm47, %v44, 0
    %v55 = vsel %vm47, %v45, 0
    %v58 = vsel %vm47, %v46, 0
    %60 = vmatprep.subr.mxu0 0.0
    %61 = vmatpush1.xpose.msra.mxu0 0.0
    %62 = vmatprep.subr.mxu0 0.0
    %63 = vmatpush1.xpose.msra.mxu0 0.0
    %64 = vmatprep.subr.mxu0 0.0
    %65 = vmatpush1.xpose.msra.mxu0 0.0
    %66 = vmatprep.subr.mxu0 0.0
    %67 = vmatpush1.xpose.msra.mxu0 0.0
    %68 = vmatprep.subr.mxu0 0.0
    %69 = vmatpush1.xpose.msra.mxu0 0.0
    %70 = vmatprep.subr.mxu0 0.0
    %71 = vmatpush1.xpose.msra.mxu0 0.0
    %72 = vmatprep.subr.mxu0 0.0
    %73 = vmatpush1.xpose.msra.mxu0 0.0
    %74 = vmatprep.subr.mxu0 0.0
    %75 = vmatpush1.xpose.msra.mxu0 0.0
    %76 = vmatprep.subr.mxu0 0.0
    %77 = vmatpush1.xpose.msra.mxu0 0.0
    %78 = vmatprep.subr.mxu0 0.0
    %79 = vmatpush1.xpose.msra.mxu0 0.0
    %80 = vmatprep.subr.mxu0 0.0
    %81 = vmatpush1.xpose.msra.mxu0 0.0
    %82 = vmatprep.subr.mxu0 0.0
    %83 = vmatpush1.xpose.msra.mxu0 0.0
    %84 = vmatprep.subr.mxu0 0.0
    %85 = vmatpush1.xpose.msra.mxu0 0.0
    %86 = vmatprep.subr.mxu0 0.0
    %87 = vmatpush1.xpose.msra.mxu0 0.0
    %88 = vmatprep.subr.mxu0 0.0
    %89 = vmatpush1.xpose.msra.mxu0 %v58
    %90 = vmatprep.subr.mxu0 0.0
    %91 = vmatpush1.xpose.msra.mxu0 %v55
    %92 = vmatprep.subr.mxu0 0.0
    %93 = vmatpush2.xpose.msra.mxu0 0.0
    %94 = vmatprep.subr.mxu0 0.0
    %95 = vmatpush2.xpose.msra.mxu0 0.0
    %96 = vmatprep.subr.mxu0 0.0
    %97 = vmatpush2.xpose.msra.mxu0 0.0
    %98 = vmatprep.subr.mxu0 0.0
    %99 = vmatpush2.xpose.msra.mxu0 0.0
    %100 = vmatprep.subr.mxu0 0.0
    %101 = vmatpush2.xpose.msra.mxu0 0.0
    %102 = vmatprep.subr.mxu0 0.0
    %103 = vmatpush2.xpose.msra.mxu0 0.0
    %104 = vmatprep.subr.mxu0 0.0
    %105 = vmatpush2.xpose.msra.mxu0 0.0
    %106 = vmatprep.subr.mxu0 0.0
    %107 = vmatpush2.xpose.msra.mxu0 0.0
    %108 = vmatprep.subr.mxu0 0.0
    %109 = vmatpush2.xpose.msra.mxu0 0.0
    %110 = vmatprep.subr.mxu0 0.0
    %111 = vmatpush2.xpose.msra.mxu0 0.0
    %112 = vmatprep.subr.mxu0 0.0
    %113 = vmatpush2.xpose.msra.mxu0 0.0
    %114 = vmatprep.subr.mxu0 0.0
    %115 = vmatpush2.xpose.msra.mxu0 0.0
    %116 = vmatprep.subr.mxu0 0.0
    %117 = vmatpush2.xpose.msra.mxu0 0.0
    %118 = vmatprep.subr.mxu0 0.0
    %119 = vmatpush2.xpose.msra.mxu0 0.0
    %120 = vmatprep.subr.mxu0 0.0
    %121 = vmatpush2.xpose.msra.mxu0 0.0
    %122 = vmatprep.subr.mxu0 0.0
    %123 = vmatpush2.xpose.msra.mxu0 0.0
    %124 = vmatprep.mubr.f32.mxu0 0.0
    %125 = vmatmul.mubr.f32.gmra.mxu0 %v49
    %v126 = vpop.f32.mrf.mxu0
    %v127 = vadd.f32 0.0, %v126
    %v128 = vpop.f32.mrf.mxu0
    %129 = vmatprep.mubr.f32.mxu0 0.0
    %130 = vmatmul.mubr.f32.gmra.mxu0 %v52
    %v131 = vpop.f32.mrf.mxu0
    %v132 = vadd.f32 0.0, %v131
    %v133 = vpop.f32.mrf.mxu0
    %134 = vdwg.mxu0
    %v135 = vld [vmem:[#allocation2] sm:$0xff]
    %v136 = vld [vmem:[#allocation2 + $0x8] sm:$0xff]
    %v137 = vsub.f32 %v127, 1.0
    %v138 = vsub.f32 %v132, 1.0
    %v139 = vstv %s35
    %v140 = vmul.f32 %v137, %v139
    %v141 = vmul.f32 %v138, %v139
    %v142 = vmul.f32 %v140, 1.442695
    %v143 = vpow.pop %v142
    %v144 = vmul.f32 %v141, 1.442695
    %v145 = vpow.pop %v144
    %vm146 = vcmask 130048
    %v147 = vsel %vm146, %v143, 0.0
    %148 = vadd.xlane.f32.xlu0 %v147
    %v149 = vpop.xlane.xlu0 %148
    %v150 = vsel %vm146, %v145, 0.0
    %151 = vadd.xlane.f32.xlu0 %v150
    %v152 = vpop.xlane.xlu0 %151
    %v153 = vadd.f32 %v135, %v149
    %v154 = vadd.f32 %v136, %v152
    %vm155 = vcmask 7168
    %156 = vst.msk [vmem:[#allocation2] sm:$0xff] %vm155, %v153
    %157 = vst.msk [vmem:[#allocation2 + $0x8] sm:$0xff] %vm155, %v154
    // Predicated region
    $region26: #{tpu_custom_call.1} parent=1 // pred_check
      %p158 = pneg %p36
    $region27: #{tpu_custom_call.1} parent=1 // pred_check_branch
      %160 = sbr.rel (%p158) target = $region29
    $region28: #{tpu_custom_call.1} parent=1 // pred_region
      %v161 = vld [vmem:[#allocation2] sm:$0xff]
      %v162 = vld [vmem:[#allocation2 + $0x8] sm:$0xff]
      %v163 = vsub.f32 %v161, 1.0
      %v164 = vsub.f32 %v162, 1.0
      %v165 = vlog2.pop %v163
      %v166 = vmul.f32 %v165, 0.6931472
      %v167 = vlog2.pop %v164
      %v168 = vmul.f32 %v167, 0.6931472
      %v169 = vld [vmem:[%s3] sm:$0xff]
      %v170 = vld [vmem:[%s3 + $0x8] sm:$0xff]
      %v171 = vsub.f32 1.0, %v169
      %v172 = vsub.f32 1.0, %v170
      %v173 = vmul.f32 %v171, %v139
      %v174 = vmul.f32 %v172, %v139
      %v175 = vadd.f32 %v166, %v173
      %v176 = vadd.f32 %v168, %v174
      %177 = vst.msk [vmem:[%s4] sm:$0xff] %vm155, %v175
      %178 = vst.msk [vmem:[%s4 + $0x8] sm:$0xff] %vm155, %v176
    $region29: #{tpu_custom_call.1} parent=1 // pred_fallthru
      _
    // Predicated region
    $region30: #{tpu_custom_call.1} parent=1 // pred_check
      _
    $region31: #{tpu_custom_call.1} parent=1 // pred_check_branch
      %180 = sbr.rel (0) target = $region33
    $region32: #{tpu_custom_call.1} parent=1 // pred_region
      _
    $region33: #{tpu_custom_call.1} parent=1 // pred_fallthru
      _
    // Predicated region
    $region34: #{tpu_custom_call.1} parent=1 // pred_check
      _
    $region35: #{tpu_custom_call.1} parent=1 // pred_check_branch
      %182 = sbr.rel (0) target = $region37
    $region36: #{tpu_custom_call.1} parent=1 // pred_region
      _
    $region37: #{tpu_custom_call.1} parent=1 // pred_fallthru
      _
    %183 = vsyncpa [#allocation5], 1

</llo_original>
